<compile_context>
chip_gen: v6e
topology: v6e:2x2x1
jax: 0.10.0
libtpu: 0.0.40
codegen_flags: <defaults>
</compile_context>

<pallas_src>
import functools

import jax
import jax.numpy as jnp
from jax.experimental import pallas as pl
from jax.experimental.pallas import tpu as pltpu

BN_EPS = 1e-5
LANE = 128
SUBLANE = 8


def _round_up(n, m):
    return ((n + m - 1) // m) * m


def _make_mlp_kernel(n_bn_blocks: int, true_batch: int, pad_batch: int, use_bf16: bool):
    """Fused MLP kernel for `n_bn_blocks` (BN -> ReLU -> Linear) blocks."""
    need_mask = pad_batch != true_batch
    inv_b = 1.0 / float(true_batch)

    def kernel(*refs):
        x_ref = refs[0]
        o_ref = refs[-1]
        params = refs[1:-1]

        def matmul(a_f32, w_ref):
            # bf16 operands, f32 MXU accumulation (weights arrive pre-cast).
            a = a_f32.astype(jnp.bfloat16) if use_bf16 else a_f32
            return jnp.dot(a, w_ref[...], preferred_element_type=jnp.float32)

        idx = 0
        # First Linear: (B, D_in) @ (D_in, H0) + b0
        w_ref, b_ref = params[idx], params[idx + 1]
        idx += 2
        h = matmul(x_ref[...].astype(jnp.float32), w_ref) + b_ref[...]

        if need_mask:
            row = jax.lax.broadcasted_iota(jnp.int32, (pad_batch, 1), 0)
            rmask = (row < true_batch).astype(jnp.float32)

        for _ in range(n_bn_blocks):
            # BatchNorm1d (training mode: batch statistics, biased variance).
            # One-pass var = E[h^2] - E[h]^2, stats over true rows only.
            g_ref, beta_ref = params[idx], params[idx + 1]
            idx += 2
            hs = h * rmask if need_mask else h
            mean = jnp.sum(hs, axis=0, keepdims=True) * inv_b
            mean_sq = jnp.sum(hs * hs, axis=0, keepdims=True) * inv_b
            var = jnp.maximum(mean_sq - mean * mean, 0.0)
            h = (h - mean) * jax.lax.rsqrt(var + BN_EPS)
            h = h * g_ref[...] + beta_ref[...]
            # ReLU
            h = jnp.maximum(h, 0.0)
            # Linear
            w_ref, b_ref = params[idx], params[idx + 1]
            idx += 2
            h = matmul(h, w_ref) + b_ref[...]

        o_ref[...] = h.astype(o_ref.dtype)

    return kernel


@functools.partial(jax.jit, static_argnums=(2, 3))
def mlp_forward(x, params, c_out, use_bf16=True):
    """params: flat list [W0, b0, (gamma, beta, W, b) * len(hidden_layer)] with
    W shaped (in, out) and 1-D params shaped (1, dim).  Returns (batch, c_out)."""
    n_bn_blocks = (len(params) - 2) // 4
    batch, in_dim = x.shape

    pad_batch = _round_up(batch, SUBLANE)
    w_dtype = jnp.bfloat16 if use_bf16 else jnp.float32

    # --- pad all feature dims to multiples of 128 lanes (zeros) -------------
    padded = []
    W0, b0 = params[0], params[1]
    d_in, d0 = W0.shape
    p_in, p_prev = _round_up(d_in, LANE), _round_up(d0, LANE)
    padded.append(jnp.pad(W0, ((0, p_in - d_in), (0, p_prev - d0))).astype(w_dtype))
    padded.append(jnp.pad(b0, ((0, 0), (0, p_prev - d0))).astype(jnp.float32))
    for blk in range(n_bn_blocks):
        g, be, W, b = params[2 + 4 * blk: 6 + 4 * blk]
        d_i, d_o = W.shape
        p_i, p_o = _round_up(d_i, LANE), _round_up(d_o, LANE)
        assert p_i == p_prev
        padded.append(jnp.pad(g, ((0, 0), (0, p_i - d_i))).astype(jnp.float32))
        padded.append(jnp.pad(be, ((0, 0), (0, p_i - d_i))).astype(jnp.float32))
        padded.append(jnp.pad(W, ((0, p_i - d_i), (0, p_o - d_o))).astype(w_dtype))
        padded.append(jnp.pad(b, ((0, 0), (0, p_o - d_o))).astype(jnp.float32))
        p_prev = p_o
    p_out = p_prev

    x_pad = jnp.pad(x, ((0, pad_batch - batch), (0, p_in - in_dim))).astype(jnp.float32)

    kernel = _make_mlp_kernel(n_bn_blocks, batch, pad_batch, use_bf16)
    vmem_spec = pl.BlockSpec(memory_space=pltpu.MemorySpace.VMEM)

    # Explicit VMEM budget with headroom; stays under the 32 MiB scoped default
    # (so it is safe on v5e/v6e/v7x) unless the model genuinely needs more.
    n_bytes = x_pad.size * 4 + pad_batch * p_out * 4
    n_bytes += sum(p.size * p.dtype.itemsize for p in padded)
    vmem_limit = int(min(32 * 1024 * 1024, max(4 * n_bytes, 8 * 1024 * 1024)))

    out = pl.pallas_call(
        kernel,
        out_shape=jax.ShapeDtypeStruct((pad_batch, p_out), jnp.float32),
        in_specs=[vmem_spec] * (1 + len(padded)),
        out_specs=vmem_spec,
        compiler_params=pltpu.CompilerParams(vmem_limit_bytes=vmem_limit),
    )(x_pad, *padded)

    # Lane-dense store inside the kernel; slicing here is free layout plumbing.
    return out[:batch, :c_out]


def init_params(key, in_dim, hidden_layer, c_out):
    """Deterministic init mirroring PyTorch defaults:
    Linear: U(-1/sqrt(fan_in), 1/sqrt(fan_in)); BN: gamma=1, beta=0."""
    params = []
    dims = [in_dim] + list(hidden_layer) + [c_out]

    def linear(key, fin, fout):
        kw, kb = jax.random.split(key)
        bound = 1.0 / jnp.sqrt(float(fin))
        w = jax.random.uniform(kw, (fin, fout), jnp.float32, -bound, bound)
        b = jax.random.uniform(kb, (1, fout), jnp.float32, -bound, bound)
        return w, b

    keys = jax.random.split(key, len(dims) - 1)
    w, b = linear(keys[0], dims[0], dims[1])
    params += [w, b]
    for i in range(1, len(dims) - 1):
        gamma = jnp.ones((1, dims[i]), jnp.float32)
        beta = jnp.zeros((1, dims[i]), jnp.float32)
        w, b = linear(keys[i], dims[i], dims[i + 1])
        params += [gamma, beta, w, b]
    return params


def reference_forward(x, params):
    """Pure-JAX f32 reference with PyTorch semantics (training-mode BN)."""
    n_bn_blocks = (len(params) - 2) // 4
    idx = 0
    h = x @ params[idx] + params[idx + 1]
    idx += 2
    for _ in range(n_bn_blocks):
        g, be = params[idx], params[idx + 1]
        idx += 2
        mean = jnp.mean(h, axis=0, keepdims=True)
        var = jnp.mean(jnp.square(h - mean), axis=0, keepdims=True)
        h = (h - mean) / jnp.sqrt(var + BN_EPS) * g + be
        h = jnp.maximum(h, 0.0)
        h = h @ params[idx] + params[idx + 1]
        idx += 2
    return h


if __name__ == "__main__":
    # configs: enc_in=4, seq_len=8, hidden_layer=[32, 64], c_out=4
    enc_in, seq_len = 4, 8
    hidden_layer = [32, 64]
    c_out = 4
    batch = 8            # NOTE: for real workloads use >=128 rows per call to
    in_dim = enc_in * seq_len  # amortize the fixed pallas_call overhead.

    key = jax.random.PRNGKey(0)
    kx, kp = jax.random.split(key)
    x = jax.random.normal(kx, (batch, in_dim), jnp.float32)
    params = init_params(kp, in_dim, hidden_layer, c_out)

    ref = reference_forward(x, params)

    # Exact-structure check: f32 matmul path.
    out_f32 = jax.block_until_ready(mlp_forward(x, params, c_out, use_bf16=False))
    assert out_f32.shape == (batch, c_out), out_f32.shape
    assert jnp.allclose(out_f32, ref, atol=1e-3, rtol=1e-3), (
        float(jnp.max(jnp.abs(out_f32 - ref)))
    )

    # Performance path: bf16 matmul operands (f32 accumulation / BN).
    out_bf16 = jax.block_until_ready(mlp_forward(x, params, c_out, use_bf16=True))
    assert out_bf16.shape == (batch, c_out), out_bf16.shape
    assert jnp.allclose(out_bf16, ref, atol=5e-2, rtol=5e-2), (
        float(jnp.max(jnp.abs(out_bf16 - ref)))
    )

    print("KERNEL_OK")
</pallas_src>

<mosaic_0001>
module attributes {stable_mosaic.version = 11 : i64} {
  func.func @kernel(%arg0: memref<8x128xf32, #tpu.memory_space<vmem>>, %arg1: memref<128x128xf32, #tpu.memory_space<vmem>>, %arg2: memref<1x128xf32, #tpu.memory_space<vmem>>, %arg3: memref<1x128xf32, #tpu.memory_space<vmem>>, %arg4: memref<1x128xf32, #tpu.memory_space<vmem>>, %arg5: memref<128x128xf32, #tpu.memory_space<vmem>>, %arg6: memref<1x128xf32, #tpu.memory_space<vmem>>, %arg7: memref<1x128xf32, #tpu.memory_space<vmem>>, %arg8: memref<1x128xf32, #tpu.memory_space<vmem>>, %arg9: memref<128x128xf32, #tpu.memory_space<vmem>>, %arg10: memref<1x128xf32, #tpu.memory_space<vmem>>, %arg11: memref<8x128xf32, #tpu.memory_space<vmem>>) attributes {dimension_semantics = [], scalar_prefetch = 0 : i64, scratch_operands = 0 : i64, tpu.core_type = #tpu.core_type<tc>} {
    %c0 = arith.constant 0 : index
    %c0_0 = arith.constant 0 : index
    %0 = vector.load %arg0[%c0, %c0_0] : memref<8x128xf32, #tpu.memory_space<vmem>>, vector<8x128xf32>
    %c0_1 = arith.constant 0 : index
    %c0_2 = arith.constant 0 : index
    %1 = vector.load %arg1[%c0_1, %c0_2] : memref<128x128xf32, #tpu.memory_space<vmem>>, vector<128x128xf32>
    %cst = arith.constant dense<0.000000e+00> : vector<8x128xf32>
    %2 = tpu.matmul %0, %1, %cst {dimension_numbers = #tpu.dot_dimension_numbers<[1], [0], [0], [1], [0, 0, 1, 1], [], []>} : vector<8x128xf32>, vector<128x128xf32>, vector<8x128xf32> -> vector<8x128xf32>
    %c0_3 = arith.constant 0 : index
    %c0_4 = arith.constant 0 : index
    %3 = vector.load %arg2[%c0_3, %c0_4] : memref<1x128xf32, #tpu.memory_space<vmem>>, vector<1x128xf32>
    %4 = vector.broadcast %3 : vector<1x128xf32> to vector<8x128xf32>
    %5 = arith.addf %2, %4 : vector<8x128xf32>
    %cst_5 = arith.constant dense<0.000000e+00> : vector<128xf32>
    %6 = vector.multi_reduction <add>, %5, %cst_5 [0] : vector<8x128xf32> to vector<128xf32>
    %7 = vector.shape_cast %6 : vector<128xf32> to vector<1x128xf32>
    %cst_6 = arith.constant 1.250000e-01 : f32
    %8 = vector.broadcast %cst_6 : f32 to vector<1x128xf32>
    %9 = arith.mulf %7, %8 : vector<1x128xf32>
    %10 = arith.mulf %5, %5 : vector<8x128xf32>
    %cst_7 = arith.constant dense<0.000000e+00> : vector<128xf32>
    %11 = vector.multi_reduction <add>, %10, %cst_7 [0] : vector<8x128xf32> to vector<128xf32>
    %12 = vector.shape_cast %11 : vector<128xf32> to vector<1x128xf32>
    %cst_8 = arith.constant 1.250000e-01 : f32
    %13 = vector.broadcast %cst_8 : f32 to vector<1x128xf32>
    %14 = arith.mulf %12, %13 : vector<1x128xf32>
    %15 = arith.mulf %9, %9 : vector<1x128xf32>
    %16 = arith.subf %14, %15 : vector<1x128xf32>
    %cst_9 = arith.constant 0.000000e+00 : f32
    %17 = vector.broadcast %cst_9 : f32 to vector<1x128xf32>
    %18 = arith.maximumf %16, %17 : vector<1x128xf32>
    %19 = vector.broadcast %9 : vector<1x128xf32> to vector<8x128xf32>
    %20 = arith.subf %5, %19 : vector<8x128xf32>
    %cst_10 = arith.constant 9.99999974E-6 : f32
    %21 = vector.broadcast %cst_10 : f32 to vector<1x128xf32>
    %22 = arith.addf %18, %21 : vector<1x128xf32>
    %23 = math.rsqrt %22 : vector<1x128xf32>
    %24 = vector.broadcast %23 : vector<1x128xf32> to vector<8x128xf32>
    %25 = arith.mulf %20, %24 : vector<8x128xf32>
    %c0_11 = arith.constant 0 : index
    %c0_12 = arith.constant 0 : index
    %26 = vector.load %arg3[%c0_11, %c0_12] : memref<1x128xf32, #tpu.memory_space<vmem>>, vector<1x128xf32>
    %27 = vector.broadcast %26 : vector<1x128xf32> to vector<8x128xf32>
    %28 = arith.mulf %25, %27 : vector<8x128xf32>
    %c0_13 = arith.constant 0 : index
    %c0_14 = arith.constant 0 : index
    %29 = vector.load %arg4[%c0_13, %c0_14] : memref<1x128xf32, #tpu.memory_space<vmem>>, vector<1x128xf32>
    %30 = vector.broadcast %29 : vector<1x128xf32> to vector<8x128xf32>
    %31 = arith.addf %28, %30 : vector<8x128xf32>
    %cst_15 = arith.constant 0.000000e+00 : f32
    %32 = vector.broadcast %cst_15 : f32 to vector<8x128xf32>
    %33 = arith.maximumf %31, %32 : vector<8x128xf32>
    %c0_16 = arith.constant 0 : index
    %c0_17 = arith.constant 0 : index
    %34 = vector.load %arg5[%c0_16, %c0_17] : memref<128x128xf32, #tpu.memory_space<vmem>>, vector<128x128xf32>
    %cst_18 = arith.constant dense<0.000000e+00> : vector<8x128xf32>
    %35 = tpu.matmul %33, %34, %cst_18 {dimension_numbers = #tpu.dot_dimension_numbers<[1], [0], [0], [1], [0, 0, 1, 1], [], []>} : vector<8x128xf32>, vector<128x128xf32>, vector<8x128xf32> -> vector<8x128xf32>
    %c0_19 = arith.constant 0 : index
    %c0_20 = arith.constant 0 : index
    %36 = vector.load %arg6[%c0_19, %c0_20] : memref<1x128xf32, #tpu.memory_space<vmem>>, vector<1x128xf32>
    %37 = vector.broadcast %36 : vector<1x128xf32> to vector<8x128xf32>
    %38 = arith.addf %35, %37 : vector<8x128xf32>
    %cst_21 = arith.constant dense<0.000000e+00> : vector<128xf32>
    %39 = vector.multi_reduction <add>, %38, %cst_21 [0] : vector<8x128xf32> to vector<128xf32>
    %40 = vector.shape_cast %39 : vector<128xf32> to vector<1x128xf32>
    %cst_22 = arith.constant 1.250000e-01 : f32
    %41 = vector.broadcast %cst_22 : f32 to vector<1x128xf32>
    %42 = arith.mulf %40, %41 : vector<1x128xf32>
    %43 = arith.mulf %38, %38 : vector<8x128xf32>
    %cst_23 = arith.constant dense<0.000000e+00> : vector<128xf32>
    %44 = vector.multi_reduction <add>, %43, %cst_23 [0] : vector<8x128xf32> to vector<128xf32>
    %45 = vector.shape_cast %44 : vector<128xf32> to vector<1x128xf32>
    %cst_24 = arith.constant 1.250000e-01 : f32
    %46 = vector.broadcast %cst_24 : f32 to vector<1x128xf32>
    %47 = arith.mulf %45, %46 : vector<1x128xf32>
    %48 = arith.mulf %42, %42 : vector<1x128xf32>
    %49 = arith.subf %47, %48 : vector<1x128xf32>
    %cst_25 = arith.constant 0.000000e+00 : f32
    %50 = vector.broadcast %cst_25 : f32 to vector<1x128xf32>
    %51 = arith.maximumf %49, %50 : vector<1x128xf32>
    %52 = vector.broadcast %42 : vector<1x128xf32> to vector<8x128xf32>
    %53 = arith.subf %38, %52 : vector<8x128xf32>
    %cst_26 = arith.constant 9.99999974E-6 : f32
    %54 = vector.broadcast %cst_26 : f32 to vector<1x128xf32>
    %55 = arith.addf %51, %54 : vector<1x128xf32>
    %56 = math.rsqrt %55 : vector<1x128xf32>
    %57 = vector.broadcast %56 : vector<1x128xf32> to vector<8x128xf32>
    %58 = arith.mulf %53, %57 : vector<8x128xf32>
    %c0_27 = arith.constant 0 : index
    %c0_28 = arith.constant 0 : index
    %59 = vector.load %arg7[%c0_27, %c0_28] : memref<1x128xf32, #tpu.memory_space<vmem>>, vector<1x128xf32>
    %60 = vector.broadcast %59 : vector<1x128xf32> to vector<8x128xf32>
    %61 = arith.mulf %58, %60 : vector<8x128xf32>
    %c0_29 = arith.constant 0 : index
    %c0_30 = arith.constant 0 : index
    %62 = vector.load %arg8[%c0_29, %c0_30] : memref<1x128xf32, #tpu.memory_space<vmem>>, vector<1x128xf32>
    %63 = vector.broadcast %62 : vector<1x128xf32> to vector<8x128xf32>
    %64 = arith.addf %61, %63 : vector<8x128xf32>
    %cst_31 = arith.constant 0.000000e+00 : f32
    %65 = vector.broadcast %cst_31 : f32 to vector<8x128xf32>
    %66 = arith.maximumf %64, %65 : vector<8x128xf32>
    %c0_32 = arith.constant 0 : index
    %c0_33 = arith.constant 0 : index
    %67 = vector.load %arg9[%c0_32, %c0_33] : memref<128x128xf32, #tpu.memory_space<vmem>>, vector<128x128xf32>
    %cst_34 = arith.constant dense<0.000000e+00> : vector<8x128xf32>
    %68 = tpu.matmul %66, %67, %cst_34 {dimension_numbers = #tpu.dot_dimension_numbers<[1], [0], [0], [1], [0, 0, 1, 1], [], []>} : vector<8x128xf32>, vector<128x128xf32>, vector<8x128xf32> -> vector<8x128xf32>
    %c0_35 = arith.constant 0 : index
    %c0_36 = arith.constant 0 : index
    %69 = vector.load %arg10[%c0_35, %c0_36] : memref<1x128xf32, #tpu.memory_space<vmem>>, vector<1x128xf32>
    %70 = vector.broadcast %69 : vector<1x128xf32> to vector<8x128xf32>
    %71 = arith.addf %68, %70 : vector<8x128xf32>
    %c0_37 = arith.constant 0 : index
    %c0_38 = arith.constant 0 : index
    %72 = vector.load %arg11[%c0_37, %c0_38] : memref<8x128xf32, #tpu.memory_space<vmem>>, vector<8x128xf32>
    tpu.vector_store %arg11[%c0_37, %c0_38], %71 {strides = array<i32>} : memref<8x128xf32, #tpu.memory_space<vmem>>, vector<8x128xf32>,
    return
  }
}

</mosaic_0001>

<llo_original>
// kernel: mlp_forward.1
$region0: #{mlp_forward.1}
  #allocation0 [shape = 'u32[]', space=smem, size = 0x4, offset = 0x4, fixed_abs, tag = 'smem constant byte address 0x4 - core index']
  #allocation1 [shape = 'u32[144,128]{1,0:T(1,128)}', space=vmem, size = 0x12000, scoped, tag = 'internal scratch']
  %s0 = inlined_call_operand.vmem [shape: f32[8,128], index: 0, kind: input, shape index: {}]
  %s1 = inlined_call_operand.vmem [shape: f32[128,128], index: 1, kind: input, shape index: {}]
  %s2 = inlined_call_operand.vmem [shape: f32[1,128], index: 2, kind: input, shape index: {}]
  %s3 = inlined_call_operand.vmem [shape: f32[1,128], index: 3, kind: input, shape index: {}]
  %s4 = inlined_call_operand.vmem [shape: f32[1,128], index: 4, kind: input, shape index: {}]
  %s5 = inlined_call_operand.vmem [shape: f32[128,128], index: 5, kind: input, shape index: {}]
  %s6 = inlined_call_operand.vmem [shape: f32[1,128], index: 6, kind: input, shape index: {}]
  %s7 = inlined_call_operand.vmem [shape: f32[1,128], index: 7, kind: input, shape index: {}]
  %s8 = inlined_call_operand.vmem [shape: f32[1,128], index: 8, kind: input, shape index: {}]
  %s9 = inlined_call_operand.vmem [shape: f32[128,128], index: 9, kind: input, shape index: {}]
  %s10 = inlined_call_operand.vmem [shape: f32[1,128], index: 10, kind: input, shape index: {}]
  %s11 = inlined_call_operand.vmem [shape: f32[8,128], index: 11, kind: output, shape index: {}]
  %s12 = sld [smem:[#allocation0]]
  $region54: #{mlp_forward.1} parent=0
    _
  %s14 = ssub.s32 1, %s12
  %s15 = scalar_select 0, %s14, %s12
  // Predicated region
  $region2: #{mlp_forward.1} parent=0 // pred_check
    _
  $region3: #{mlp_forward.1} parent=0 // pred_check_branch
    %17 = sbr.rel (0) target = $region5
  $region4: #{mlp_forward.1} parent=0 // pred_region
    _
  $region5: #{mlp_forward.1} parent=0 // pred_fallthru
    _
  // Predicated region
  $region6: #{mlp_forward.1} parent=0 // pred_check
    _
  $region7: #{mlp_forward.1} parent=0 // pred_check_branch
    %19 = sbr.rel (0) target = $region9
  $region8: #{mlp_forward.1} parent=0 // pred_region
    _
  $region9: #{mlp_forward.1} parent=0 // pred_fallthru
    _
  // Predicated region
  $region10: #{mlp_forward.1} parent=0 // pred_check
    _
  $region11: #{mlp_forward.1} parent=0 // pred_check_branch
    %21 = sbr.rel (0) target = $region13
  $region12: #{mlp_forward.1} parent=0 // pred_region
    _
  $region13: #{mlp_forward.1} parent=0 // pred_fallthru
    _
  // Predicated region
  $region14: #{mlp_forward.1} parent=0 // pred_check
    _
  $region15: #{mlp_forward.1} parent=0 // pred_check_branch
    %23 = sbr.rel (0) target = $region17
  $region16: #{mlp_forward.1} parent=0 // pred_region
    _
  $region17: #{mlp_forward.1} parent=0 // pred_fallthru
    _
  // Predicated region
  $region18: #{mlp_forward.1} parent=0 // pred_check
    _
  $region19: #{mlp_forward.1} parent=0 // pred_check_branch
    %25 = sbr.rel (0) target = $region21
  $region20: #{mlp_forward.1} parent=0 // pred_region
    _
  $region21: #{mlp_forward.1} parent=0 // pred_fallthru
    _
  // Predicated region
  $region22: #{mlp_forward.1} parent=0 // pred_check
    _
  $region23: #{mlp_forward.1} parent=0 // pred_check_branch
    %27 = sbr.rel (0) target = $region25
  $region24: #{mlp_forward.1} parent=0 // pred_region
    _
  $region25: #{mlp_forward.1} parent=0 // pred_fallthru
    _
  // Predicated region
  $region26: #{mlp_forward.1} parent=0 // pred_check
    _
  $region27: #{mlp_forward.1} parent=0 // pred_check_branch
    %29 = sbr.rel (0) target = $region29
  $region28: #{mlp_forward.1} parent=0 // pred_region
    _
  $region29: #{mlp_forward.1} parent=0 // pred_fallthru
    _
  // Predicated region
  $region30: #{mlp_forward.1} parent=0 // pred_check
    _
  $region31: #{mlp_forward.1} parent=0 // pred_check_branch
    %31 = sbr.rel (0) target = $region33
  $region32: #{mlp_forward.1} parent=0 // pred_region
    _
  $region33: #{mlp_forward.1} parent=0 // pred_fallthru
    _
  // Predicated region
  $region34: #{mlp_forward.1} parent=0 // pred_check
    _
  $region35: #{mlp_forward.1} parent=0 // pred_check_branch
    %33 = sbr.rel (0) target = $region37
  $region36: #{mlp_forward.1} parent=0 // pred_region
    _
  $region37: #{mlp_forward.1} parent=0 // pred_fallthru
    _
  // Predicated region
  $region38: #{mlp_forward.1} parent=0 // pred_check
    _
  $region39: #{mlp_forward.1} parent=0 // pred_check_branch
    %35 = sbr.rel (0) target = $region41
  $region40: #{mlp_forward.1} parent=0 // pred_region
    _
  $region41: #{mlp_forward.1} parent=0 // pred_fallthru
    _
  // Predicated region
  $region42: #{mlp_forward.1} parent=0 // pred_check
    _
  $region43: #{mlp_forward.1} parent=0 // pred_check_branch
    %37 = sbr.rel (0) target = $region45
  $region44: #{mlp_forward.1} parent=0 // pred_region
    _
  $region45: #{mlp_forward.1} parent=0 // pred_fallthru
    _
  %v38 = vld [vmem:[%s0] sm:$0xff]
  %v39 = vld [vmem:[%s1] sm:$0xff]
  %v40 = vld [vmem:[%s1 + $0x8] sm:$0xff]
  %v41 = vld [vmem:[%s1 + $0x10] sm:$0xff]
  %v42 = vld [vmem:[%s1 + $0x18] sm:$0xff]
  %v43 = vld [vmem:[%s1 + $0x20] sm:$0xff]
  %v44 = vld [vmem:[%s1 + $0x28] sm:$0xff]
  %v45 = vld [vmem:[%s1 + $0x30] sm:$0xff]
  %v46 = vld [vmem:[%s1 + $0x38] sm:$0xff]
  %v47 = vld [vmem:[%s1 + $0x40] sm:$0xff]
  %v48 = vld [vmem:[%s1 + $0x48] sm:$0xff]
  %v49 = vld [vmem:[%s1 + $0x50] sm:$0xff]
  %v50 = vld [vmem:[%s1 + $0x58] sm:$0xff]
  %v51 = vld [vmem:[%s1 + $0x60] sm:$0xff]
  %v52 = vld [vmem:[%s1 + $0x68] sm:$0xff]
  %v53 = vld [vmem:[%s1 + $0x70] sm:$0xff]
  %v54 = vld [vmem:[%s1 + $0x78] sm:$0xff]
  %v55 = vld [vmem:[%s2] sm:$0x1]
  %v57 = vlaneseq
  %v58 = vshrl.u32 %v57, 7
  %v59 = vsub.s32 0, %v58
  %v60 = vrot.slane %v55, %v59
  %62 = vmatprep.subr.mxu0 0.0
  %63 = vmatpush1.msra.mxu0 %v54
  %64 = vmatprep.subr.mxu0 0.0
  %65 = vmatpush1.msra.mxu0 %v53
  %66 = vmatprep.subr.mxu0 0.0
  %67 = vmatpush1.msra.mxu0 %v52
  %68 = vmatprep.subr.mxu0 0.0
  %69 = vmatpush1.msra.mxu0 %v51
  %70 = vmatprep.subr.mxu0 0.0
  %71 = vmatpush1.msra.mxu0 %v50
  %72 = vmatprep.subr.mxu0 0.0
  %73 = vmatpush1.msra.mxu0 %v49
  %74 = vmatprep.subr.mxu0 0.0
  %75 = vmatpush1.msra.mxu0 %v48
  %76 = vmatprep.subr.mxu0 0.0
  %77 = vmatpush1.msra.mxu0 %v47
  %78 = vmatprep.subr.mxu0 0.0
  %79 = vmatpush1.msra.mxu0 %v46
  %80 = vmatprep.subr.mxu0 0.0
  %81 = vmatpush1.msra.mxu0 %v45
  %82 = vmatprep.subr.mxu0 0.0
  %83 = vmatpush1.msra.mxu0 %v44
  %84 = vmatprep.subr.mxu0 0.0
  %85 = vmatpush1.msra.mxu0 %v43
  %86 = vmatprep.subr.mxu0 0.0
  %87 = vmatpush1.msra.mxu0 %v42
  %88 = vmatprep.subr.mxu0 0.0
  %89 = vmatpush1.msra.mxu0 %v41
  %90 = vmatprep.subr.mxu0 0.0
  %91 = vmatpush1.msra.mxu0 %v40
  %92 = vmatprep.subr.mxu0 0.0
  %93 = vmatpush1.msra.mxu0 %v39
  %94 = vmatprep.subr.mxu0 0.0
  %95 = vmatpush2.msra.mxu0 0.0
  %96 = vmatprep.subr.mxu0 0.0
  %97 = vmatpush2.msra.mxu0 0.0
  %98 = vmatprep.subr.mxu0 0.0
  %99 = vmatpush2.msra.mxu0 0.0
  %100 = vmatprep.subr.mxu0 0.0
  %101 = vmatpush2.msra.mxu0 0.0
  %102 = vmatprep.subr.mxu0 0.0
  %103 = vmatpush2.msra.mxu0 0.0
  %104 = vmatprep.subr.mxu0 0.0
  %105 = vmatpush2.msra.mxu0 0.0
  %106 = vmatprep.subr.mxu0 0.0
  %107 = vmatpush2.msra.mxu0 0.0
  %108 = vmatprep.subr.mxu0 0.0
  %109 = vmatpush2.msra.mxu0 0.0
  %110 = vmatprep.subr.mxu0 0.0
  %111 = vmatpush2.msra.mxu0 0.0
  %112 = vmatprep.subr.mxu0 0.0
  %113 = vmatpush2.msra.mxu0 0.0
  %114 = vmatprep.subr.mxu0 0.0
  %115 = vmatpush2.msra.mxu0 0.0
  %116 = vmatprep.subr.mxu0 0.0
  %117 = vmatpush2.msra.mxu0 0.0
  %118 = vmatprep.subr.mxu0 0.0
  %119 = vmatpush2.msra.mxu0 0.0
  %120 = vmatprep.subr.mxu0 0.0
  %121 = vmatpush2.msra.mxu0 0.0
  %122 = vmatprep.subr.mxu0 0.0
  %123 = vmatpush2.msra.mxu0 0.0
  %124 = vmatprep.subr.mxu0 0.0
  %125 = vmatpush2.msra.mxu0 0.0
  %126 = vmatprep.mubr.f32.mxu0 0.0
  %127 = vmatmul.mubr.f32.gmra.mxu0 %v38
  %v128 = vpop.f32.mrf.mxu0
  %v129 = vadd.f32 %v60, %v128
  %v130 = vpop.f32.mrf.mxu0
  %131 = vdwg.mxu0
  %v132 = vrot.slane %v129, 4
  %v133 = vadd.f32 %v129, %v132
  %v134 = vrot.slane %v133, 2
  %v135 = vadd.f32 %v133, %v134
  %v136 = vrot.slane %v135, 1
  %v137 = vadd.f32 %v135, %v136
  %v138 = vmul.f32 %v137, 0.125
  %v139 = vmul.f32 %v129, %v129
  %v140 = vrot.slane %v139, 4
  %v141 = vadd.f32 %v139, %v140
  %v142 = vrot.slane %v141, 2
  %v143 = vadd.f32 %v141, %v142
  %v144 = vrot.slane %v143, 1
  %v145 = vadd.f32 %v143, %v144
  %v146 = vmul.f32 %v145, 0.125
  %v147 = vmul.f32 %v138, %v138
  %v148 = vsub.f32 %v146, %v147
  %v149 = vmax.f32 %v148, 0.0
  %v150 = vsub.f32 %v129, %v138
  %v151 = vadd.f32 %v149, 1e-05
  %v152 = vrsqrt.pop %v151
  %v153 = vmul.f32 %v150, %v152
  %v154 = vld [vmem:[%s3] sm:$0x1]
  %v156 = vlaneseq
  %v157 = vshrl.u32 %v156, 7
  %v158 = vsub.s32 0, %v157
  %v159 = vrot.slane %v154, %v158
  %v161 = vmul.f32 %v153, %v159
  %v162 = vld [vmem:[%s4] sm:$0x1]
  %v164 = vlaneseq
  %v165 = vshrl.u32 %v164, 7
  %v166 = vsub.s32 0, %v165
  %v167 = vrot.slane %v162, %v166
  %v169 = vadd.f32 %v161, %v167
  %v170 = vmax.f32 %v169, 0.0
  %v171 = vld [vmem:[%s5] sm:$0xff]
  %v172 = vld [vmem:[%s5 + $0x8] sm:$0xff]
  %v173 = vld [vmem:[%s5 + $0x10] sm:$0xff]
  %v174 = vld [vmem:[%s5 + $0x18] sm:$0xff]
  %v175 = vld [vmem:[%s5 + $0x20] sm:$0xff]
  %v176 = vld [vmem:[%s5 + $0x28] sm:$0xff]
  %v177 = vld [vmem:[%s5 + $0x30] sm:$0xff]
  %v178 = vld [vmem:[%s5 + $0x38] sm:$0xff]
  %v179 = vld [vmem:[%s5 + $0x40] sm:$0xff]
  %v180 = vld [vmem:[%s5 + $0x48] sm:$0xff]
  %v181 = vld [vmem:[%s5 + $0x50] sm:$0xff]
  %v182 = vld [vmem:[%s5 + $0x58] sm:$0xff]
  %v183 = vld [vmem:[%s5 + $0x60] sm:$0xff]
  %v184 = vld [vmem:[%s5 + $0x68] sm:$0xff]
  %v185 = vld [vmem:[%s5 + $0x70] sm:$0xff]
  %v186 = vld [vmem:[%s5 + $0x78] sm:$0xff]
  %v187 = vld [vmem:[%s6] sm:$0x1]
  %v189 = vlaneseq
  %v190 = vshrl.u32 %v189, 7
  %v191 = vsub.s32 0, %v190
  %v192 = vrot.slane %v187, %v191
  %194 = vmatprep.subr.mxu0 0.0
  %195 = vmatpush1.msra.mxu0 %v186
  %196 = vmatprep.subr.mxu0 0.0
  %197 = vmatpush1.msra.mxu0 %v185
  %198 = vmatprep.subr.mxu0 0.0
  %199 = vmatpush1.msra.mxu0 %v184
  %200 = vmatprep.subr.mxu0 0.0
  %201 = vmatpush1.msra.mxu0 %v183
  %202 = vmatprep.subr.mxu0 0.0
  %203 = vmatpush1.msra.mxu0 %v182
  %204 = vmatprep.subr.mxu0 0.0
  %205 = vmatpush1.msra.mxu0 %v181
  %206 = vmatprep.subr.mxu0 0.0
  %207 = vmatpush1.msra.mxu0 %v180
  %208 = vmatprep.subr.mxu0 0.0
  %209 = vmatpush1.msra.mxu0 %v179
  %210 = vmatprep.subr.mxu0 0.0
  %211 = vmatpush1.msra.mxu0 %v178
  %212 = vmatprep.subr.mxu0 0.0
  %213 = vmatpush1.msra.mxu0 %v177
  %214 = vmatprep.subr.mxu0 0.0
  %215 = vmatpush1.msra.mxu0 %v176
  %216 = vmatprep.subr.mxu0 0.0
  %217 = vmatpush1.msra.mxu0 %v175
  %218 = vmatprep.subr.mxu0 0.0
  %219 = vmatpush1.msra.mxu0 %v174
  %220 = vmatprep.subr.mxu0 0.0
  %221 = vmatpush1.msra.mxu0 %v173
  %222 = vmatprep.subr.mxu0 0.0
  %223 = vmatpush1.msra.mxu0 %v172
  %224 = vmatprep.subr.mxu0 0.0
  %225 = vmatpush1.msra.mxu0 %v171
  %226 = vmatprep.subr.mxu0 0.0
  %227 = vmatpush2.msra.mxu0 0.0
  %228 = vmatprep.subr.mxu0 0.0
  %229 = vmatpush2.msra.mxu0 0.0
  %230 = vmatprep.subr.mxu0 0.0
  %231 = vmatpush2.msra.mxu0 0.0
  %232 = vmatprep.subr.mxu0 0.0
  %233 = vmatpush2.msra.mxu0 0.0
  %234 = vmatprep.subr.mxu0 0.0
  %235 = vmatpush2.msra.mxu0 0.0
  %236 = vmatprep.subr.mxu0 0.0
  %237 = vmatpush2.msra.mxu0 0.0
  %238 = vmatprep.subr.mxu0 0.0
  %239 = vmatpush2.msra.mxu0 0.0
  %240 = vmatprep.subr.mxu0 0.0
  %241 = vmatpush2.msra.mxu0 0.0
  %242 = vmatprep.subr.mxu0 0.0
  %243 = vmatpush2.msra.mxu0 0.0
  %244 = vmatprep.subr.mxu0 0.0
  %245 = vmatpush2.msra.mxu0 0.0
  %246 = vmatprep.subr.mxu0 0.0
  %247 = vmatpush2.msra.mxu0 0.0
  %248 = vmatprep.subr.mxu0 0.0
  %249 = vmatpush2.msra.mxu0 0.0
  %250 = vmatprep.subr.mxu0 0.0
  %251 = vmatpush2.msra.mxu0 0.0
  %252 = vmatprep.subr.mxu0 0.0
  %253 = vmatpush2.msra.mxu0 0.0
  %254 = vmatprep.subr.mxu0 0.0
  %255 = vmatpush2.msra.mxu0 0.0
  %256 = vmatprep.subr.mxu0 0.0
  %257 = vmatpush2.msra.mxu0 0.0
  %258 = vmatprep.mubr.f32.mxu0 0.0
  %259 = vmatmul.mubr.f32.gmra.mxu0 %v170
  %v260 = vpop.f32.mrf.mxu0
  %v261 = vadd.f32 %v192, %v260
  %v262 = vpop.f32.mrf.mxu0
  %263 = vdwg.mxu0
  %v264 = vrot.slane %v261, 4
  %v265 = vadd.f32 %v261, %v264
  %v266 = vrot.slane %v265, 2
  %v267 = vadd.f32 %v265, %v266
  %v268 = vrot.slane %v267, 1
  %v269 = vadd.f32 %v267, %v268
  %v270 = vmul.f32 %v269, 0.125
  %v271 = vmul.f32 %v261, %v261
  %v272 = vrot.slane %v271, 4
  %v273 = vadd.f32 %v271, %v272
  %v274 = vrot.slane %v273, 2
  %v275 = vadd.f32 %v273, %v274
  %v276 = vrot.slane %v275, 1
  %v277 = vadd.f32 %v275, %v276
  %v278 = vmul.f32 %v277, 0.125
  %v279 = vmul.f32 %v270, %v270
  %v280 = vsub.f32 %v278, %v279
  %v281 = vmax.f32 %v280, 0.0
  %v282 = vsub.f32 %v261, %v270
  %v283 = vadd.f32 %v281, 1e-05
  %v284 = vrsqrt.pop %v283
  %v285 = vmul.f32 %v282, %v284
  %v286 = vld [vmem:[%s7] sm:$0x1]
  %v288 = vlaneseq
  %v289 = vshrl.u32 %v288, 7
  %v290 = vsub.s32 0, %v289
  %v291 = vrot.slane %v286, %v290
  %v293 = vmul.f32 %v285, %v291
  %v294 = vld [vmem:[%s8] sm:$0x1]
  %v296 = vlaneseq
  %v297 = vshrl.u32 %v296, 7
  %v298 = vsub.s32 0, %v297
  %v299 = vrot.slane %v294, %v298
  %v301 = vadd.f32 %v293, %v299
  %v302 = vmax.f32 %v301, 0.0
  %v303 = vld [vmem:[%s9] sm:$0xff]
  %v304 = vld [vmem:[%s9 + $0x8] sm:$0xff]
  %v305 = vld [vmem:[%s9 + $0x10] sm:$0xff]
  %v306 = vld [vmem:[%s9 + $0x18] sm:$0xff]
  %v307 = vld [vmem:[%s9 + $0x20] sm:$0xff]
  %v308 = vld [vmem:[%s9 + $0x28] sm:$0xff]
  %v309 = vld [vmem:[%s9 + $0x30] sm:$0xff]
  %v310 = vld [vmem:[%s9 + $0x38] sm:$0xff]
  %v311 = vld [vmem:[%s9 + $0x40] sm:$0xff]
  %v312 = vld [vmem:[%s9 + $0x48] sm:$0xff]
  %v313 = vld [vmem:[%s9 + $0x50] sm:$0xff]
  %v314 = vld [vmem:[%s9 + $0x58] sm:$0xff]
  %v315 = vld [vmem:[%s9 + $0x60] sm:$0xff]
  %v316 = vld [vmem:[%s9 + $0x68] sm:$0xff]
  %v317 = vld [vmem:[%s9 + $0x70] sm:$0xff]
  %v318 = vld [vmem:[%s9 + $0x78] sm:$0xff]
  %v319 = vld [vmem:[%s10] sm:$0x1]
  %v321 = vlaneseq
  %v322 = vshrl.u32 %v321, 7
  %v323 = vsub.s32 0, %v322
  %v324 = vrot.slane %v319, %v323
  %326 = vmatprep.subr.mxu0 0.0
  %327 = vmatpush1.msra.mxu0 %v318
  %328 = vmatprep.subr.mxu0 0.0
  %329 = vmatpush1.msra.mxu0 %v317
  %330 = vmatprep.subr.mxu0 0.0
  %331 = vmatpush1.msra.mxu0 %v316
  %332 = vmatprep.subr.mxu0 0.0
  %333 = vmatpush1.msra.mxu0 %v315
  %334 = vmatprep.subr.mxu0 0.0
  %335 = vmatpush1.msra.mxu0 %v314
  %336 = vmatprep.subr.mxu0 0.0
  %337 = vmatpush1.msra.mxu0 %v313
  %338 = vmatprep.subr.mxu0 0.0
  %339 = vmatpush1.msra.mxu0 %v312
  %340 = vmatprep.subr.mxu0 0.0
  %341 = vmatpush1.msra.mxu0 %v311
  %342 = vmatprep.subr.mxu0 0.0
  %343 = vmatpush1.msra.mxu0 %v310
  %344 = vmatprep.subr.mxu0 0.0
  %345 = vmatpush1.msra.mxu0 %v309
  %346 = vmatprep.subr.mxu0 0.0
  %347 = vmatpush1.msra.mxu0 %v308
  %348 = vmatprep.subr.mxu0 0.0
  %349 = vmatpush1.msra.mxu0 %v307
  %350 = vmatprep.subr.mxu0 0.0
  %351 = vmatpush1.msra.mxu0 %v306
  %352 = vmatprep.subr.mxu0 0.0
  %353 = vmatpush1.msra.mxu0 %v305
  %354 = vmatprep.subr.mxu0 0.0
  %355 = vmatpush1.msra.mxu0 %v304
  %356 = vmatprep.subr.mxu0 0.0
  %357 = vmatpush1.msra.mxu0 %v303
  %358 = vmatprep.subr.mxu0 0.0
  %359 = vmatpush2.msra.mxu0 0.0
  %360 = vmatprep.subr.mxu0 0.0
  %361 = vmatpush2.msra.mxu0 0.0
  %362 = vmatprep.subr.mxu0 0.0
  %363 = vmatpush2.msra.mxu0 0.0
  %364 = vmatprep.subr.mxu0 0.0
  %365 = vmatpush2.msra.mxu0 0.0
  %366 = vmatprep.subr.mxu0 0.0
  %367 = vmatpush2.msra.mxu0 0.0
  %368 = vmatprep.subr.mxu0 0.0
  %369 = vmatpush2.msra.mxu0 0.0
  %370 = vmatprep.subr.mxu0 0.0
  %371 = vmatpush2.msra.mxu0 0.0
  %372 = vmatprep.subr.mxu0 0.0
  %373 = vmatpush2.msra.mxu0 0.0
  %374 = vmatprep.subr.mxu0 0.0
  %375 = vmatpush2.msra.mxu0 0.0
  %376 = vmatprep.subr.mxu0 0.0
  %377 = vmatpush2.msra.mxu0 0.0
  %378 = vmatprep.subr.mxu0 0.0
  %379 = vmatpush2.msra.mxu0 0.0
  %380 = vmatprep.subr.mxu0 0.0
  %381 = vmatpush2.msra.mxu0 0.0
  %382 = vmatprep.subr.mxu0 0.0
  %383 = vmatpush2.msra.mxu0 0.0
  %384 = vmatprep.subr.mxu0 0.0
  %385 = vmatpush2.msra.mxu0 0.0
  %386 = vmatprep.subr.mxu0 0.0
  %387 = vmatpush2.msra.mxu0 0.0
  %388 = vmatprep.subr.mxu0 0.0
  %389 = vmatpush2.msra.mxu0 0.0
  %390 = vmatprep.mubr.f32.mxu0 0.0
  %391 = vmatmul.mubr.f32.gmra.mxu0 %v302
  %v392 = vpop.f32.mrf.mxu0
  %v393 = vadd.f32 %v324, %v392
  %v394 = vpop.f32.mrf.mxu0
  %395 = vdwg.mxu0
  %396 = vst [vmem:[%s11] sm:$0xff] %v393
  // Predicated region
  $region46: #{mlp_forward.1} parent=0 // pred_check
    _
  $region47: #{mlp_forward.1} parent=0 // pred_check_branch
    %398 = sbr.rel (0) target = $region49
  $region48: #{mlp_forward.1} parent=0 // pred_region
    _
  $region49: #{mlp_forward.1} parent=0 // pred_fallthru
    _
  // Predicated region
  $region50: #{mlp_forward.1} parent=0 // pred_check
    _
  $region51: #{mlp_forward.1} parent=0 // pred_check_branch
    %400 = sbr.rel (0) target = $region53
  $region52: #{mlp_forward.1} parent=0 // pred_region
    _
  $region53: #{mlp_forward.1} parent=0 // pred_fallthru
    _

</llo_original>
